<compile_context>
chip_gen: v7x
topology: tpu7x:2x2x1
jax: 0.10.0
libtpu: 0.0.40
codegen_flags: <defaults>
</compile_context>

<pallas_src>
import jax
import jax.numpy as jnp
from jax import lax
from jax.experimental import pallas as pl
from jax.experimental.pallas import tpu as pltpu

# Fixed (non-trainable) Sobel kernels from the module's __init__ (for reference).
_KX = ((-1.0, 0.0, 1.0), (-2.0, 0.0, 2.0), (-1.0, 0.0, 1.0))
_KY = ((-1.0, -2.0, -1.0), (0.0, 0.0, 0.0), (1.0, 2.0, 1.0))


def _grad_loss_kernel(pred_ref, gt_ref, out_ref):
    # pred_ref / gt_ref: (Bt, H, W) unpadded image planes for this batch tile.
    # out_ref: (1, 8, 128) f32 partial-sum tile for this grid step:
    #   row 0 -> sum |abs(pgx) - abs(ggx)|, row 1 -> sum |abs(pgy) - abs(ggy)|
    p = pred_ref[...].astype(jnp.float32)
    g = gt_ref[...].astype(jnp.float32)
    bt, h, w = p.shape

    zcol = jnp.zeros((bt, h, 1), jnp.float32)
    zrow = jnp.zeros((bt, 1, w), jnp.float32)

    def sh_l(x):   # out[..., j] = x[..., j + 1], zero past the right edge
        return jnp.concatenate([x[:, :, 1:], zcol], axis=2)

    def sh_r(x):   # out[..., j] = x[..., j - 1], zero past the left edge
        return jnp.concatenate([zcol, x[:, :, :-1]], axis=2)

    def sh_u(x):   # out[:, i, :] = x[:, i + 1, :], zero past the bottom edge
        return jnp.concatenate([x[:, 1:, :], zrow], axis=1)

    def sh_d(x):   # out[:, i, :] = x[:, i - 1, :], zero past the top edge
        return jnp.concatenate([zrow, x[:, :-1, :]], axis=1)

    def sobel(x):
        # Separable Sobel (matches F.conv2d cross-correlation with padding=1):
        #   Gx = [1,2,1]^T (x) [-1,0,1]   Gy = [-1,0,1]^T (x) [1,2,1]
        xl = sh_l(x)
        xr = sh_r(x)
        d = xl - xr                        # horizontal [-1, 0, 1] pass
        s = xr + 2.0 * x + xl              # horizontal [ 1, 2, 1] pass
        gx = sh_d(d) + 2.0 * d + sh_u(d)   # vertical   [ 1, 2, 1]
        gy = sh_u(s) - sh_d(s)             # vertical   [-1, 0, 1]
        return gx, gy

    pgx, pgy = sobel(p)
    ggx, ggy = sobel(g)

    sx = jnp.sum(jnp.abs(jnp.abs(pgx) - jnp.abs(ggx)))
    sy = jnp.sum(jnp.abs(jnp.abs(pgy) - jnp.abs(ggy)))

    row = lax.broadcasted_iota(jnp.int32, out_ref.shape, 1)
    out_ref[...] = jnp.where(row == 0, sx, jnp.where(row == 1, sy, 0.0))


def gradient_loss(pred, gt, *, batch_tile=None):
    """pred, gt: (N, 1, H, W) float32 or bfloat16.  Returns scalar loss (f32)."""
    assert pred.shape == gt.shape and pred.shape[1] == 1, "expects NCHW with C == 1"
    N, _, H, W = pred.shape

    x = pred[:, 0]            # (N, H, W), kept in native dtype (bf16 streams fine)
    y = gt[:, 0]

    # Batch-tile sizing: 2 inputs x 2 pipeline buffers x tile bytes <= ~12 MiB.
    per_image = H * W * jnp.dtype(x.dtype).itemsize
    max_bt = max(1, (12 * 1024 * 1024) // (4 * per_image))
    bt = batch_tile if batch_tile is not None else min(N, 8, max_bt)
    bt = max(1, min(bt, N))

    num_tiles = -(-N // bt)
    n_padded = num_tiles * bt
    if n_padded != N:
        # Zero images contribute exactly 0 to both sums -> safe batch padding.
        pad = n_padded - N
        x = jnp.concatenate([x, jnp.zeros((pad, H, W), x.dtype)], axis=0)
        y = jnp.concatenate([y, jnp.zeros((pad, H, W), y.dtype)], axis=0)

    partials = pl.pallas_call(
        _grad_loss_kernel,
        out_shape=jax.ShapeDtypeStruct((num_tiles, 8, 128), jnp.float32),
        grid_spec=pltpu.PrefetchScalarGridSpec(
            num_scalar_prefetch=0,
            grid=(num_tiles,),
            in_specs=[
                pl.BlockSpec((bt, H, W), lambda i: (i, 0, 0)),
                pl.BlockSpec((bt, H, W), lambda i: (i, 0, 0)),
            ],
            out_specs=pl.BlockSpec((1, 8, 128), lambda i: (i, 0, 0)),
        ),
        compiler_params=pltpu.CompilerParams(
            dimension_semantics=("parallel",),
            vmem_limit_bytes=32 * 1024 * 1024,
        ),
    )(x, y)

    n_elem = jnp.float32(N * H * W)   # true element count (batch padding excluded)
    sum_x = jnp.sum(partials[:, 0, 0])
    sum_y = jnp.sum(partials[:, 1, 0])
    return (sum_x + sum_y) / n_elem


def _reference(pred, gt):
    # pure-JAX reference for validation (mirrors the PyTorch module exactly)
    kx = jnp.array(_KX, jnp.float32)[None, None]   # (1,1,3,3) OIHW
    ky = jnp.array(_KY, jnp.float32)[None, None]

    def conv(t, k):
        return lax.conv_general_dilated(
            t.astype(jnp.float32), k, window_strides=(1, 1),
            padding=((1, 1), (1, 1)),
            dimension_numbers=("NCHW", "OIHW", "NCHW"))

    pgx, pgy = conv(pred, kx), conv(pred, ky)
    ggx, ggy = conv(gt, kx), conv(gt, ky)
    lx = jnp.mean(jnp.abs(jnp.abs(pgx) - jnp.abs(ggx)))
    ly = jnp.mean(jnp.abs(jnp.abs(pgy) - jnp.abs(ggy)))
    return lx + ly


if __name__ == "__main__":
    key = jax.random.PRNGKey(0)
    k1, k2, k3, k4 = jax.random.split(key, 4)

    # Case 1: the nominal small shape.
    N, C, H, W = 2, 1, 16, 16
    pred = jax.random.normal(k1, (N, C, H, W), jnp.float32)
    gt = jax.random.normal(k2, (N, C, H, W), jnp.float32)
    loss = gradient_loss(pred, gt)
    jax.block_until_ready(loss)
    ref = _reference(pred, gt)
    assert jnp.allclose(loss, ref, rtol=2e-5, atol=2e-5), (loss, ref)

    # Case 2: exercises batch tiling + batch padding (N not a multiple of the tile).
    N2, H2, W2 = 9, 16, 24
    pred2 = jax.random.normal(k3, (N2, 1, H2, W2), jnp.float32)
    gt2 = jax.random.normal(k4, (N2, 1, H2, W2), jnp.float32)
    loss2 = gradient_loss(pred2, gt2)
    jax.block_until_ready(loss2)
    ref2 = _reference(pred2, gt2)
    assert jnp.allclose(loss2, ref2, rtol=2e-5, atol=2e-5), (loss2, ref2)

    print("KERNEL_OK")
</pallas_src>

<mosaic_0001>
module attributes {stable_mosaic.version = 11 : i64} {
  func.func @_grad_loss_kernel(%arg0: i32, %arg1: memref<2x16x16xf32, #tpu.memory_space<vmem>>, %arg2: memref<2x16x16xf32, #tpu.memory_space<vmem>>, %arg3: memref<1x8x128xf32, #tpu.memory_space<vmem>>) attributes {dimension_semantics = [#tpu.dimension_semantics<parallel>], iteration_bounds = array<i64: 1>, scalar_prefetch = 0 : i64, scratch_operands = 0 : i64, tpu.core_type = #tpu.core_type<tc>, window_params = [{transform_indices = @transform_0, window_bounds = array<i64: 2, 16, 16>}, {transform_indices = @transform_1, window_bounds = array<i64: 2, 16, 16>}, {transform_indices = @transform_2, window_bounds = array<i64: 1, 8, 128>}]} {
    %c0 = arith.constant 0 : index
    %c0_0 = arith.constant 0 : index
    %c0_1 = arith.constant 0 : index
    %0 = vector.load %arg1[%c0, %c0_0, %c0_1] : memref<2x16x16xf32, #tpu.memory_space<vmem>>, vector<2x16x16xf32>
    %c0_2 = arith.constant 0 : index
    %c0_3 = arith.constant 0 : index
    %c0_4 = arith.constant 0 : index
    %1 = vector.load %arg2[%c0_2, %c0_3, %c0_4] : memref<2x16x16xf32, #tpu.memory_space<vmem>>, vector<2x16x16xf32>
    %cst = arith.constant 0.000000e+00 : f32
    %2 = vector.broadcast %cst : f32 to vector<2x16x1xf32>
    %cst_5 = arith.constant 0.000000e+00 : f32
    %3 = vector.broadcast %cst_5 : f32 to vector<2x1x16xf32>
    %4 = vector.extract_strided_slice %0 {offsets = [0, 0, 1], sizes = [2, 16, 15], strides = [1, 1, 1]} : vector<2x16x16xf32> to vector<2x16x15xf32>
    %5 = tpu.concatenate %4, %2 in 2 : vector<2x16x15xf32>, vector<2x16x1xf32> -> vector<2x16x16xf32>
    %6 = vector.extract_strided_slice %0 {offsets = [0, 0, 0], sizes = [2, 16, 15], strides = [1, 1, 1]} : vector<2x16x16xf32> to vector<2x16x15xf32>
    %7 = tpu.concatenate %2, %6 in 2 : vector<2x16x1xf32>, vector<2x16x15xf32> -> vector<2x16x16xf32>
    %8 = arith.subf %5, %7 : vector<2x16x16xf32>
    %cst_6 = arith.constant 2.000000e+00 : f32
    %9 = vector.broadcast %cst_6 : f32 to vector<2x16x16xf32>
    %10 = arith.mulf %9, %0 : vector<2x16x16xf32>
    %11 = arith.addf %7, %10 : vector<2x16x16xf32>
    %12 = arith.addf %11, %5 : vector<2x16x16xf32>
    %13 = vector.extract_strided_slice %8 {offsets = [0, 0, 0], sizes = [2, 15, 16], strides = [1, 1, 1]} : vector<2x16x16xf32> to vector<2x15x16xf32>
    %14 = tpu.concatenate %3, %13 in 1 : vector<2x1x16xf32>, vector<2x15x16xf32> -> vector<2x16x16xf32>
    %cst_7 = arith.constant 2.000000e+00 : f32
    %15 = vector.broadcast %cst_7 : f32 to vector<2x16x16xf32>
    %16 = arith.mulf %15, %8 : vector<2x16x16xf32>
    %17 = arith.addf %14, %16 : vector<2x16x16xf32>
    %18 = vector.extract_strided_slice %8 {offsets = [0, 1, 0], sizes = [2, 15, 16], strides = [1, 1, 1]} : vector<2x16x16xf32> to vector<2x15x16xf32>
    %19 = tpu.concatenate %18, %3 in 1 : vector<2x15x16xf32>, vector<2x1x16xf32> -> vector<2x16x16xf32>
    %20 = arith.addf %17, %19 : vector<2x16x16xf32>
    %21 = vector.extract_strided_slice %12 {offsets = [0, 1, 0], sizes = [2, 15, 16], strides = [1, 1, 1]} : vector<2x16x16xf32> to vector<2x15x16xf32>
    %22 = tpu.concatenate %21, %3 in 1 : vector<2x15x16xf32>, vector<2x1x16xf32> -> vector<2x16x16xf32>
    %23 = vector.extract_strided_slice %12 {offsets = [0, 0, 0], sizes = [2, 15, 16], strides = [1, 1, 1]} : vector<2x16x16xf32> to vector<2x15x16xf32>
    %24 = tpu.concatenate %3, %23 in 1 : vector<2x1x16xf32>, vector<2x15x16xf32> -> vector<2x16x16xf32>
    %25 = arith.subf %22, %24 : vector<2x16x16xf32>
    %26 = vector.extract_strided_slice %1 {offsets = [0, 0, 1], sizes = [2, 16, 15], strides = [1, 1, 1]} : vector<2x16x16xf32> to vector<2x16x15xf32>
    %27 = tpu.concatenate %26, %2 in 2 : vector<2x16x15xf32>, vector<2x16x1xf32> -> vector<2x16x16xf32>
    %28 = vector.extract_strided_slice %1 {offsets = [0, 0, 0], sizes = [2, 16, 15], strides = [1, 1, 1]} : vector<2x16x16xf32> to vector<2x16x15xf32>
    %29 = tpu.concatenate %2, %28 in 2 : vector<2x16x1xf32>, vector<2x16x15xf32> -> vector<2x16x16xf32>
    %30 = arith.subf %27, %29 : vector<2x16x16xf32>
    %cst_8 = arith.constant 2.000000e+00 : f32
    %31 = vector.broadcast %cst_8 : f32 to vector<2x16x16xf32>
    %32 = arith.mulf %31, %1 : vector<2x16x16xf32>
    %33 = arith.addf %29, %32 : vector<2x16x16xf32>
    %34 = arith.addf %33, %27 : vector<2x16x16xf32>
    %35 = vector.extract_strided_slice %30 {offsets = [0, 0, 0], sizes = [2, 15, 16], strides = [1, 1, 1]} : vector<2x16x16xf32> to vector<2x15x16xf32>
    %36 = tpu.concatenate %3, %35 in 1 : vector<2x1x16xf32>, vector<2x15x16xf32> -> vector<2x16x16xf32>
    %cst_9 = arith.constant 2.000000e+00 : f32
    %37 = vector.broadcast %cst_9 : f32 to vector<2x16x16xf32>
    %38 = arith.mulf %37, %30 : vector<2x16x16xf32>
    %39 = arith.addf %36, %38 : vector<2x16x16xf32>
    %40 = vector.extract_strided_slice %30 {offsets = [0, 1, 0], sizes = [2, 15, 16], strides = [1, 1, 1]} : vector<2x16x16xf32> to vector<2x15x16xf32>
    %41 = tpu.concatenate %40, %3 in 1 : vector<2x15x16xf32>, vector<2x1x16xf32> -> vector<2x16x16xf32>
    %42 = arith.addf %39, %41 : vector<2x16x16xf32>
    %43 = vector.extract_strided_slice %34 {offsets = [0, 1, 0], sizes = [2, 15, 16], strides = [1, 1, 1]} : vector<2x16x16xf32> to vector<2x15x16xf32>
    %44 = tpu.concatenate %43, %3 in 1 : vector<2x15x16xf32>, vector<2x1x16xf32> -> vector<2x16x16xf32>
    %45 = vector.extract_strided_slice %34 {offsets = [0, 0, 0], sizes = [2, 15, 16], strides = [1, 1, 1]} : vector<2x16x16xf32> to vector<2x15x16xf32>
    %46 = tpu.concatenate %3, %45 in 1 : vector<2x1x16xf32>, vector<2x15x16xf32> -> vector<2x16x16xf32>
    %47 = arith.subf %44, %46 : vector<2x16x16xf32>
    %48 = math.absf %20 : vector<2x16x16xf32>
    %49 = math.absf %42 : vector<2x16x16xf32>
    %50 = arith.subf %48, %49 : vector<2x16x16xf32>
    %51 = math.absf %50 : vector<2x16x16xf32>
    %52 = vector.shape_cast %51 : vector<2x16x16xf32> to vector<1x2x16x16xf32>
    %cst_10 = arith.constant dense<0.000000e+00> : vector<1xf32>
    %53 = vector.multi_reduction <add>, %52, %cst_10 [1, 2, 3] : vector<1x2x16x16xf32> to vector<1xf32>
    %54 = vector.shape_cast %53 : vector<1xf32> to vector<1x1x1x1xf32>
    %55 = vector.extract %54[0, 0, 0, 0] : f32 from vector<1x1x1x1xf32>
    %56 = math.absf %25 : vector<2x16x16xf32>
    %57 = math.absf %47 : vector<2x16x16xf32>
    %58 = arith.subf %56, %57 : vector<2x16x16xf32>
    %59 = math.absf %58 : vector<2x16x16xf32>
    %60 = vector.shape_cast %59 : vector<2x16x16xf32> to vector<1x2x16x16xf32>
    %cst_11 = arith.constant dense<0.000000e+00> : vector<1xf32>
    %61 = vector.multi_reduction <add>, %60, %cst_11 [1, 2, 3] : vector<1x2x16x16xf32> to vector<1xf32>
    %62 = vector.shape_cast %61 : vector<1xf32> to vector<1x1x1x1xf32>
    %63 = vector.extract %62[0, 0, 0, 0] : f32 from vector<1x1x1x1xf32>
    %64 = tpu.iota {dimensions = array<i32: 1>} : vector<1x8x128xi32>
    %c0_i32 = arith.constant 0 : i32
    %65 = vector.broadcast %c0_i32 : i32 to vector<1x8x128xi32>
    %66 = arith.cmpi eq, %64, %65 : vector<1x8x128xi32>
    %c1_i32 = arith.constant 1 : i32
    %67 = vector.broadcast %c1_i32 : i32 to vector<1x8x128xi32>
    %68 = arith.cmpi eq, %64, %67 : vector<1x8x128xi32>
    %cst_12 = arith.constant 0.000000e+00 : f32
    %69 = vector.broadcast %63 : f32 to vector<1x8x128xf32>
    %70 = vector.broadcast %cst_12 : f32 to vector<1x8x128xf32>
    %71 = arith.select %68, %69, %70 : vector<1x8x128xi1>, vector<1x8x128xf32>
    %72 = vector.broadcast %55 : f32 to vector<1x8x128xf32>
    %73 = arith.select %66, %72, %71 : vector<1x8x128xi1>, vector<1x8x128xf32>
    %c0_13 = arith.constant 0 : index
    %c0_14 = arith.constant 0 : index
    %c0_15 = arith.constant 0 : index
    %74 = vector.load %arg3[%c0_13, %c0_14, %c0_15] : memref<1x8x128xf32, #tpu.memory_space<vmem>>, vector<1x8x128xf32>
    tpu.vector_store %arg3[%c0_13, %c0_14, %c0_15], %73 {strides = array<i32>} : memref<1x8x128xf32, #tpu.memory_space<vmem>>, vector<1x8x128xf32>,
    return
  }
  func.func @transform_0(%arg0: i32) -> (i32, i32, i32) {
    %c0_i32 = arith.constant 0 : i32
    %c0_i32_0 = arith.constant 0 : i32
    %c0_i32_1 = arith.constant 0 : i32
    return %arg0, %c0_i32, %c0_i32_0 : i32, i32, i32
  }
  func.func @transform_1(%arg0: i32) -> (i32, i32, i32) {
    %c0_i32 = arith.constant 0 : i32
    %c0_i32_0 = arith.constant 0 : i32
    %c0_i32_1 = arith.constant 0 : i32
    return %arg0, %c0_i32, %c0_i32_0 : i32, i32, i32
  }
  func.func @transform_2(%arg0: i32) -> (i32, i32, i32) {
    %c0_i32 = arith.constant 0 : i32
    %c0_i32_0 = arith.constant 0 : i32
    %c0_i32_1 = arith.constant 0 : i32
    return %arg0, %c0_i32, %c0_i32_0 : i32, i32, i32
  }
}

</mosaic_0001>

<llo_original>
// kernel: tpu_custom_call.1
$region0: #{tpu_custom_call.1}
  #allocation0 [shape = 'u32[]', space=smem, size = 0x4, offset = 0x4, fixed_abs, tag = 'smem constant byte address 0x4 - core index']
  #allocation1 [shape = 'u32[144,128]{1,0:T(1,128)}', space=vmem, size = 0x12000, scoped, tag = 'internal scratch']
  %s0 = inlined_call_operand.hbm [shape: f32[2,16,16], index: 0, kind: input, shape index: {}]
  %s1 = inlined_call_operand.hbm [shape: f32[2,16,16], index: 1, kind: input, shape index: {}]
  %s2 = inlined_call_operand.hbm [shape: f32[1,8,128], index: 2, kind: output, shape index: {}]
  %s3 = sld [smem:[#allocation0]]
  $region26: #{tpu_custom_call.1} parent=0
    _
  %s5 = ssub.s32 1, %s3
  %s6 = scalar_select 0, %s5, %s3
  $region1: #{tpu_custom_call.1} parent=0
    #allocation2 [shape = 'u8[16384]{0}', space=vmem, size = 0x4000, scoped, tag = 'input window, operand 0, single buffered']
    #allocation3 [shape = 's32[1]{0}', space=sflag, size = 0x4, scoped, tag = 'scoped memory for tpu_custom_call.1']
    #allocation4 [shape = 's32[1]{0}', space=sflag, size = 0x4, scoped, tag = 'scoped memory for tpu_custom_call.1']
    #allocation5 [shape = 'u8[16384]{0}', space=vmem, size = 0x4000, scoped, tag = 'input window, operand 1, single buffered']
    #allocation6 [shape = 's32[1]{0}', space=sflag, size = 0x4, scoped, tag = 'scoped memory for tpu_custom_call.1']
    #allocation7 [shape = 'u8[4096]{0}', space=vmem, size = 0x1000, scoped, tag = 'output window, operand 0, single buffered']
    %7 = vsyncpa [#allocation3], 0
    %8 = vsyncpa [#allocation6], 0
    %9 = vsyncpa [#allocation4], 0
    // Predicated region
    $region2: #{tpu_custom_call.1} parent=1 // pred_check
      _
    $region3: #{tpu_custom_call.1} parent=1 // pred_check_branch
      %11 = sbr.rel (0) target = $region5
    $region4: #{tpu_custom_call.1} parent=1 // pred_region
      %s13 = ssub.s32 512, 512
      %14 = vsyncadd [#allocation3], %s13
      %s15 = sshll.u32 [#allocation2], 4
      %s16 = int_to_ptr.vmem [resolvable:$true] %s15
      %21 = dma.hbm_to_vmem [thread:$0]  %s0, 512, %s16, [#allocation3], 128, 128, 8
    $region5: #{tpu_custom_call.1} parent=1 // pred_fallthru
      _
    // Predicated region
    $region6: #{tpu_custom_call.1} parent=1 // pred_check
      _
    $region7: #{tpu_custom_call.1} parent=1 // pred_check_branch
      %23 = sbr.rel (0) target = $region9
    $region8: #{tpu_custom_call.1} parent=1 // pred_region
      %s25 = ssub.s32 512, 512
      %26 = vsyncadd [#allocation6], %s25
      %s27 = sshll.u32 [#allocation5], 4
      %s28 = int_to_ptr.vmem [resolvable:$true] %s27
      %33 = dma.hbm_to_vmem [thread:$0]  %s1, 512, %s28, [#allocation6], 128, 128, 8
    $region9: #{tpu_custom_call.1} parent=1 // pred_fallthru
      _
    // Predicated region
    $region10: #{tpu_custom_call.1} parent=1 // pred_check
      _
    $region11: #{tpu_custom_call.1} parent=1 // pred_check_branch
      %35 = sbr.rel (0) target = $region13
    $region12: #{tpu_custom_call.1} parent=1 // pred_region
      %36 = dma.done [#allocation3], 512
    $region13: #{tpu_custom_call.1} parent=1 // pred_fallthru
      _
    // Predicated region
    $region14: #{tpu_custom_call.1} parent=1 // pred_check
      _
    $region15: #{tpu_custom_call.1} parent=1 // pred_check_branch
      %38 = sbr.rel (0) target = $region17
    $region16: #{tpu_custom_call.1} parent=1 // pred_region
      %39 = dma.done [#allocation6], 512
    $region17: #{tpu_custom_call.1} parent=1 // pred_fallthru
      _
    %v40 = vld [vmem:[#allocation2] sm:$0xff]
    %v41 = vld [vmem:[#allocation2 + $0x8] sm:$0xff]
    %v42 = vld [vmem:[#allocation2 + $0x10] sm:$0xff]
    %v43 = vld [vmem:[#allocation2 + $0x18] sm:$0xff]
    %v44 = vld [vmem:[#allocation5] sm:$0xff]
    %v45 = vld [vmem:[#allocation5 + $0x8] sm:$0xff]
    %v46 = vld [vmem:[#allocation5 + $0x10] sm:$0xff]
    %v47 = vld [vmem:[#allocation5 + $0x18] sm:$0xff]
    %52 = vrot.lane.b32.xlu0 %v40, 127
    %v53 = vpop.permute.xlu0 %52
    %54 = vrot.lane.b32.xlu0 %v41, 127
    %v55 = vpop.permute.xlu0 %54
    %56 = vrot.lane.b32.xlu0 %v42, 127
    %v57 = vpop.permute.xlu0 %56
    %58 = vrot.lane.b32.xlu0 %v43, 127
    %v59 = vpop.permute.xlu0 %58
    %vm64 = vcmask 121856
    %v65 = vsel %vm64, %v53, 0.0
    %v66 = vsel %vm64, %v55, 0.0
    %v67 = vsel %vm64, %v57, 0.0
    %v68 = vsel %vm64, %v59, 0.0
    %69 = vrot.lane.b32.xlu0 %v40, 1
    %v70 = vpop.permute.xlu0 %69
    %71 = vrot.lane.b32.xlu0 %v41, 1
    %v72 = vpop.permute.xlu0 %71
    %73 = vrot.lane.b32.xlu0 %v42, 1
    %v74 = vpop.permute.xlu0 %73
    %75 = vrot.lane.b32.xlu0 %v43, 1
    %v76 = vpop.permute.xlu0 %75
    %vm81 = vcmask 7168
    %v82 = vsel %vm81, 0.0, %v70
    %v83 = vsel %vm81, 0.0, %v72
    %v84 = vsel %vm81, 0.0, %v74
    %v85 = vsel %vm81, 0.0, %v76
    %v86 = vsub.f32 %v65, %v82
    %v87 = vsub.f32 %v66, %v83
    %v88 = vsub.f32 %v67, %v84
    %v89 = vsub.f32 %v68, %v85
    %v90 = vmul.f32 %v40, 2.0
    %v91 = vmul.f32 %v41, 2.0
    %v92 = vmul.f32 %v42, 2.0
    %v93 = vmul.f32 %v43, 2.0
    %v94 = vadd.f32 %v82, %v90
    %v95 = vadd.f32 %v83, %v91
    %v96 = vadd.f32 %v84, %v92
    %v97 = vadd.f32 %v85, %v93
    %v98 = vadd.f32 %v94, %v65
    %v99 = vadd.f32 %v95, %v66
    %v100 = vadd.f32 %v96, %v67
    %v101 = vadd.f32 %v97, %v68
    %vm106 = vcmask 1040384
    %v107 = vrot.slane %v86, 7
    %v108 = vrot.slane %v87, 7
    %v109 = vsel %vm106, %v107, %v108
    %v110 = vrot.slane %v88, 7
    %v111 = vrot.slane %v89, 7
    %v112 = vsel %vm106, %v110, %v111
    %v117 = vsel %vm106, 0.0, %v107
    %v118 = vsel %vm106, 0.0, %v110
    %v119 = vmul.f32 %v86, 2.0
    %v120 = vmul.f32 %v87, 2.0
    %v121 = vmul.f32 %v88, 2.0
    %v122 = vmul.f32 %v89, 2.0
    %v123 = vadd.f32 %v117, %v119
    %v124 = vadd.f32 %v109, %v120
    %v125 = vadd.f32 %v118, %v121
    %v126 = vadd.f32 %v112, %v122
    %vm127 = vcmask 1046528
    %v128 = vrot.slane %v86, 1
    %v129 = vrot.slane %v87, 1
    %v130 = vsel %vm127, %v128, %v129
    %v131 = vrot.slane %v88, 1
    %v132 = vrot.slane %v89, 1
    %v133 = vsel %vm127, %v131, %v132
    %v138 = vsel %vm127, %v129, 0.0
    %v139 = vsel %vm127, %v132, 0.0
    %v140 = vadd.f32 %v123, %v130
    %v141 = vadd.f32 %v124, %v138
    %v142 = vadd.f32 %v125, %v133
    %v143 = vadd.f32 %v126, %v139
    %v148 = vrot.slane %v98, 1
    %v149 = vrot.slane %v99, 1
    %v150 = vsel %vm127, %v148, %v149
    %v151 = vrot.slane %v100, 1
    %v152 = vrot.slane %v101, 1
    %v153 = vsel %vm127, %v151, %v152
    %v158 = vsel %vm127, %v149, 0.0
    %v159 = vsel %vm127, %v152, 0.0
    %v160 = vrot.slane %v98, 7
    %v161 = vrot.slane %v99, 7
    %v162 = vsel %vm106, %v160, %v161
    %v163 = vrot.slane %v100, 7
    %v164 = vrot.slane %v101, 7
    %v165 = vsel %vm106, %v163, %v164
    %v170 = vsel %vm106, 0.0, %v160
    %v171 = vsel %vm106, 0.0, %v163
    %v172 = vsub.f32 %v150, %v170
    %v173 = vsub.f32 %v158, %v162
    %v174 = vsub.f32 %v153, %v171
    %v175 = vsub.f32 %v159, %v165
    %180 = vrot.lane.b32.xlu0 %v44, 127
    %v181 = vpop.permute.xlu0 %180
    %182 = vrot.lane.b32.xlu0 %v45, 127
    %v183 = vpop.permute.xlu0 %182
    %184 = vrot.lane.b32.xlu0 %v46, 127
    %v185 = vpop.permute.xlu0 %184
    %186 = vrot.lane.b32.xlu0 %v47, 127
    %v187 = vpop.permute.xlu0 %186
    %v192 = vsel %vm64, %v181, 0.0
    %v193 = vsel %vm64, %v183, 0.0
    %v194 = vsel %vm64, %v185, 0.0
    %v195 = vsel %vm64, %v187, 0.0
    %196 = vrot.lane.b32.xlu0 %v44, 1
    %v197 = vpop.permute.xlu0 %196
    %198 = vrot.lane.b32.xlu0 %v45, 1
    %v199 = vpop.permute.xlu0 %198
    %200 = vrot.lane.b32.xlu0 %v46, 1
    %v201 = vpop.permute.xlu0 %200
    %202 = vrot.lane.b32.xlu0 %v47, 1
    %v203 = vpop.permute.xlu0 %202
    %v208 = vsel %vm81, 0.0, %v197
    %v209 = vsel %vm81, 0.0, %v199
    %v210 = vsel %vm81, 0.0, %v201
    %v211 = vsel %vm81, 0.0, %v203
    %v212 = vsub.f32 %v192, %v208
    %v213 = vsub.f32 %v193, %v209
    %v214 = vsub.f32 %v194, %v210
    %v215 = vsub.f32 %v195, %v211
    %v216 = vmul.f32 %v44, 2.0
    %v217 = vmul.f32 %v45, 2.0
    %v218 = vmul.f32 %v46, 2.0
    %v219 = vmul.f32 %v47, 2.0
    %v220 = vadd.f32 %v208, %v216
    %v221 = vadd.f32 %v209, %v217
    %v222 = vadd.f32 %v210, %v218
    %v223 = vadd.f32 %v211, %v219
    %v224 = vadd.f32 %v220, %v192
    %v225 = vadd.f32 %v221, %v193
    %v226 = vadd.f32 %v222, %v194
    %v227 = vadd.f32 %v223, %v195
    %v232 = vrot.slane %v212, 7
    %v233 = vrot.slane %v213, 7
    %v234 = vsel %vm106, %v232, %v233
    %v235 = vrot.slane %v214, 7
    %v236 = vrot.slane %v215, 7
    %v237 = vsel %vm106, %v235, %v236
    %v242 = vsel %vm106, 0.0, %v232
    %v243 = vsel %vm106, 0.0, %v235
    %v244 = vmul.f32 %v212, 2.0
    %v245 = vmul.f32 %v213, 2.0
    %v246 = vmul.f32 %v214, 2.0
    %v247 = vmul.f32 %v215, 2.0
    %v248 = vadd.f32 %v242, %v244
    %v249 = vadd.f32 %v234, %v245
    %v250 = vadd.f32 %v243, %v246
    %v251 = vadd.f32 %v237, %v247
    %v252 = vrot.slane %v212, 1
    %v253 = vrot.slane %v213, 1
    %v254 = vsel %vm127, %v252, %v253
    %v255 = vrot.slane %v214, 1
    %v256 = vrot.slane %v215, 1
    %v257 = vsel %vm127, %v255, %v256
    %v262 = vsel %vm127, %v253, 0.0
    %v263 = vsel %vm127, %v256, 0.0
    %v264 = vadd.f32 %v248, %v254
    %v265 = vadd.f32 %v249, %v262
    %v266 = vadd.f32 %v250, %v257
    %v267 = vadd.f32 %v251, %v263
    %v272 = vrot.slane %v224, 1
    %v273 = vrot.slane %v225, 1
    %v274 = vsel %vm127, %v272, %v273
    %v275 = vrot.slane %v226, 1
    %v276 = vrot.slane %v227, 1
    %v277 = vsel %vm127, %v275, %v276
    %v282 = vsel %vm127, %v273, 0.0
    %v283 = vsel %vm127, %v276, 0.0
    %v284 = vrot.slane %v224, 7
    %v285 = vrot.slane %v225, 7
    %v286 = vsel %vm106, %v284, %v285
    %v287 = vrot.slane %v226, 7
    %v288 = vrot.slane %v227, 7
    %v289 = vsel %vm106, %v287, %v288
    %v294 = vsel %vm106, 0.0, %v284
    %v295 = vsel %vm106, 0.0, %v287
    %v296 = vsub.f32 %v274, %v294
    %v297 = vsub.f32 %v282, %v286
    %v298 = vsub.f32 %v277, %v295
    %v299 = vsub.f32 %v283, %v289
    %v300 = vand.u32 2147483647, %v140
    %v301 = vand.u32 2147483647, %v141
    %v302 = vand.u32 2147483647, %v142
    %v303 = vand.u32 2147483647, %v143
    %v304 = vand.u32 2147483647, %v264
    %v305 = vand.u32 2147483647, %v265
    %v306 = vand.u32 2147483647, %v266
    %v307 = vand.u32 2147483647, %v267
    %v308 = vsub.f32 %v300, %v304
    %v309 = vsub.f32 %v301, %v305
    %v310 = vsub.f32 %v302, %v306
    %v311 = vsub.f32 %v303, %v307
    %v312 = vand.u32 2147483647, %v308
    %v313 = vand.u32 2147483647, %v309
    %v314 = vand.u32 2147483647, %v310
    %v315 = vand.u32 2147483647, %v311
    %vm316 = vcmask 130048
    %v317 = vsel %vm316, %v312, 0.0
    %v318 = vsel %vm316, %v313, 0.0
    %v319 = vadd.f32 %v317, %v318
    %v320 = vsel %vm316, %v314, 0.0
    %v321 = vadd.f32 %v319, %v320
    %v322 = vsel %vm316, %v315, 0.0
    %v323 = vadd.f32 %v321, %v322
    %324 = vadd.xlane.f32.xlu0 %v323
    %v325 = vpop.xlane.xlu0 %324
    %v326 = vrot.slane %v325, 4
    %v327 = vadd.f32 %v325, %v326
    %v328 = vrot.slane %v327, 2
    %v329 = vadd.f32 %v327, %v328
    %v330 = vrot.slane %v329, 1
    %v331 = vadd.f32 %v329, %v330
    %s332 = vtos %v331
    %v333 = vand.u32 2147483647, %v172
    %v334 = vand.u32 2147483647, %v173
    %v335 = vand.u32 2147483647, %v174
    %v336 = vand.u32 2147483647, %v175
    %v337 = vand.u32 2147483647, %v296
    %v338 = vand.u32 2147483647, %v297
    %v339 = vand.u32 2147483647, %v298
    %v340 = vand.u32 2147483647, %v299
    %v341 = vsub.f32 %v333, %v337
    %v342 = vsub.f32 %v334, %v338
    %v343 = vsub.f32 %v335, %v339
    %v344 = vsub.f32 %v336, %v340
    %v345 = vand.u32 2147483647, %v341
    %v346 = vand.u32 2147483647, %v342
    %v347 = vand.u32 2147483647, %v343
    %v348 = vand.u32 2147483647, %v344
    %v349 = vsel %vm316, %v345, 0.0
    %v350 = vsel %vm316, %v346, 0.0
    %v351 = vadd.f32 %v349, %v350
    %v352 = vsel %vm316, %v347, 0.0
    %v353 = vadd.f32 %v351, %v352
    %v354 = vsel %vm316, %v348, 0.0
    %v355 = vadd.f32 %v353, %v354
    %356 = vadd.xlane.f32.xlu0 %v355
    %v357 = vpop.xlane.xlu0 %356
    %v358 = vrot.slane %v357, 4
    %v359 = vadd.f32 %v357, %v358
    %v360 = vrot.slane %v359, 2
    %v361 = vadd.f32 %v359, %v360
    %v362 = vrot.slane %v361, 1
    %v363 = vadd.f32 %v361, %v362
    %s364 = vtos %v363
    %v365 = vlaneseq
    %v366 = vshrl.u32 %v365, 7
    %vm367 = vcmp.eq.s32.totalorder %v366, 0
    %vm368 = vcmp.eq.s32.totalorder %v366, 1
    %v369 = vstv %s364
    %v370 = vsel %vm368, %v369, 0.0
    %v371 = vstv %s332
    %v372 = vsel %vm367, %v371, %v370
    %373 = vst [vmem:[#allocation7] sm:$0xff] %v372
    // Predicated region
    $region18: #{tpu_custom_call.1} parent=1 // pred_check
      _
    $region19: #{tpu_custom_call.1} parent=1 // pred_check_branch
      %375 = sbr.rel (0) target = $region21
    $region20: #{tpu_custom_call.1} parent=1 // pred_region
      %s377 = ssub.s32 128, 128
      %378 = vsyncadd [#allocation4], %s377
      %s380 = sshll.u32 [#allocation7], 4
      %s381 = int_to_ptr.vmem [resolvable:$true] %s380
      %383 = dma.vmem_to_hbm [thread:$0]  %s381, 128, %s2, [#allocation4]
    $region21: #{tpu_custom_call.1} parent=1 // pred_fallthru
      _
    // Predicated region
    $region22: #{tpu_custom_call.1} parent=1 // pred_check
      _
    $region23: #{tpu_custom_call.1} parent=1 // pred_check_branch
      %385 = sbr.rel (0) target = $region25
    $region24: #{tpu_custom_call.1} parent=1 // pred_region
      %386 = dma.done [#allocation4], 128
    $region25: #{tpu_custom_call.1} parent=1 // pred_fallthru
      _
    %387 = vsyncpa [#allocation3], 1
    %388 = vsyncpa [#allocation6], 1
    %389 = vsyncpa [#allocation4], 1

</llo_original>
